<compile_context>
chip_gen: v7x
topology: tpu7x:2x2x1
jax: 0.10.0
libtpu: 0.0.40
codegen_flags: <defaults>
</compile_context>

<pallas_src>
import functools

import jax
import jax.numpy as jnp
from jax.experimental import pallas as pl
from jax.experimental.pallas import tpu as pltpu


def _round_up(v, m):
    return (v + m - 1) // m * m


def _choose_tile(dim, preferred, align=256):
    """Largest `align`-multiple tile <= preferred that divides dim; dim itself
    if dim <= preferred; dim (full block) as a last resort for unaligned dims."""
    if dim <= preferred:
        return dim
    t = (preferred // align) * align
    while t >= align:
        if dim % t == 0:
            return t
        t -= align
    return dim


def _vmem_limit_bytes(est):
    """Generation-aware scoped-VMEM budget: 2x the estimate (headroom for the
    compiler), at least 32 MiB, capped at 75% of physical VMEM."""
    try:
        cap = pltpu.get_tpu_info().vmem_capacity_bytes
    except Exception:
        cap = 128 * 1024 * 1024
    return int(min(max(2 * est, 32 * 1024 * 1024), int(cap * 0.75)))


# ---------------------------------------------------------------------------
# Kernels
# ---------------------------------------------------------------------------

def _xa_kernel(x_ref, aT_ref, o_ref, acc_ref, *, scaling):
    """xA = scaling * (x @ A^T).  Grid: (M/tm, K/tk), K innermost."""
    k = pl.program_id(1)
    p = jnp.dot(x_ref[...], aT_ref[...], preferred_element_type=jnp.float32)

    @pl.when(k == 0)
    def _():
        acc_ref[...] = p

    @pl.when(k != 0)
    def _():
        acc_ref[...] += p

    @pl.when(k == pl.num_programs(1) - 1)
    def _():
        o_ref[...] = (acc_ref[...] * scaling).astype(o_ref.dtype)


def _lora_kernel(x_ref, wT_ref, b_ref, xa_ref, bT_ref, o_ref, acc_ref):
    """y = x @ W^T + b + xA @ B^T.  Grid: (M/tm, N/tn, K/tk), K innermost.
    x_ref:  (tm, tk)     wT_ref: (tk, tn)     b_ref: (1, tn)
    xa_ref: (tm, r_pad)  bT_ref: (r_pad, tn)  acc_ref: (tm, tn) f32 scratch."""
    k = pl.program_id(2)
    p = jnp.dot(x_ref[...], wT_ref[...], preferred_element_type=jnp.float32)

    @pl.when(k == 0)
    def _():
        acc_ref[...] = p          # direct assign: no zero-fill + RMW

    @pl.when(k != 0)
    def _():
        acc_ref[...] += p

    @pl.when(k == pl.num_programs(2) - 1)
    def _():
        lora = jnp.dot(xa_ref[...], bT_ref[...],
                       preferred_element_type=jnp.float32)
        out = acc_ref[...] + b_ref[...].astype(jnp.float32) + lora
        o_ref[...] = out.astype(o_ref.dtype)


# ---------------------------------------------------------------------------
# One-time parameter layout prep (call at load time, NOT per forward)
# ---------------------------------------------------------------------------

def prepare_lora_params(weight, bias, lora_A, lora_B, *, dtype=None,
                        k_align=256, n_align=256, r_align=128):
    """Transpose into (K, N) MXU-friendly layout and pad:
      * K (in_features) and N (out_features) up to multiples of 256 so tiles
        can always be 256-aligned (v6e/v7x MXU width) and output stores are
        lane-dense,
      * LoRA rank r up to 128 lanes (unmasked vld/vst on the small operands).
    Returns (wT, b2d, aT, bT, out_features)."""
    out_features, in_features = weight.shape
    r = lora_A.shape[0]
    if dtype is None:
        dtype = weight.dtype

    k_pad = _round_up(in_features, k_align)
    n_pad = _round_up(out_features, n_align)
    r_pad = _round_up(r, r_align)

    wT = jnp.zeros((k_pad, n_pad), dtype)
    wT = wT.at[:in_features, :out_features].set(weight.T.astype(dtype))
    b2d = jnp.zeros((1, n_pad), dtype)
    b2d = b2d.at[:, :out_features].set(bias.astype(dtype).reshape(1, -1))
    aT = jnp.zeros((k_pad, r_pad), dtype)
    aT = aT.at[:in_features, :r].set(lora_A.T.astype(dtype))
    bT = jnp.zeros((r_pad, n_pad), dtype)
    bT = bT.at[:r, :out_features].set(lora_B.T.astype(dtype))
    return wT, b2d, aT, bT, out_features


# ---------------------------------------------------------------------------
# Forward wrapper
# ---------------------------------------------------------------------------

def lora_linear(x, wT, b2d, aT, bT, out_features, *, scaling,
                block_m=512, block_n=1024, block_k=1024):
    """x: [..., in_features]; wT/b2d/aT/bT from prepare_lora_params.
    Returns [..., out_features]."""
    lead_shape = x.shape[:-1]
    in_features = x.shape[-1]
    k_pad, n_pad = wT.shape
    r_pad = aT.shape[1]

    M = 1
    for d in lead_shape:
        M *= d
    x2d = x.reshape(M, in_features)

    # Pad K up to the (pre-padded) weight K so zero columns drop out of dots.
    if k_pad != in_features:
        x2d = jnp.pad(x2d, ((0, 0), (0, k_pad - in_features)))

    # Row tile: multiple of the sublane packing for x's dtype (f32->8, bf16->16).
    isz_x = jnp.dtype(x.dtype).itemsize
    sub = 8 * max(1, 4 // isz_x)
    tm = _round_up(min(block_m, _round_up(M, sub)), sub)
    M_pad = _round_up(M, tm)
    if M_pad != M:
        x2d = jnp.pad(x2d, ((0, M_pad - M), (0, 0)))

    tk = _choose_tile(k_pad, block_k, 256)
    tn = _choose_tile(n_pad, block_n, 256)
    # v7x has 2 TensorCores: make sure at least one parallel axis has >= 2
    # blocks for decode-sized inputs (single M block).
    if M_pad // tm == 1 and n_pad // tn == 1 and tn % 512 == 0:
        tn //= 2

    # ---- pass 1: xA = scaling * (x @ A^T)  (tiny, rank-128 output) ----
    xa = pl.pallas_call(
        functools.partial(_xa_kernel, scaling=scaling),
        out_shape=jax.ShapeDtypeStruct((M_pad, r_pad), x.dtype),
        grid_spec=pltpu.PrefetchScalarGridSpec(
            num_scalar_prefetch=0,
            grid=(M_pad // tm, k_pad // tk),
            in_specs=[
                pl.BlockSpec((tm, tk), lambda i, k: (i, k)),      # x
                pl.BlockSpec((tk, r_pad), lambda i, k: (k, 0)),   # A^T
            ],
            out_specs=pl.BlockSpec((tm, r_pad), lambda i, k: (i, 0)),
            scratch_shapes=[pltpu.VMEM((tm, r_pad), jnp.float32)],
        ),
        compiler_params=pltpu.CompilerParams(
            dimension_semantics=("parallel", "arbitrary")),
    )(x2d, aT)

    # ---- pass 2: y = x @ W^T + b + xA @ B^T ----
    isz_w = jnp.dtype(wT.dtype).itemsize
    isz_b = jnp.dtype(bT.dtype).itemsize
    est = (2 * (tm * tk * isz_x            # x tile (double-buffered)
                + tk * tn * isz_w          # W^T tile
                + tm * tn * isz_x          # output tile
                + tn * isz_w               # bias tile
                + tm * r_pad * isz_x       # xA tile
                + r_pad * tn * isz_b)      # B^T tile
           + tm * tn * 4)                  # f32 accumulator scratch
    vmem_limit = _vmem_limit_bytes(est)

    out2d = pl.pallas_call(
        _lora_kernel,
        out_shape=jax.ShapeDtypeStruct((M_pad, n_pad), x.dtype),
        grid_spec=pltpu.PrefetchScalarGridSpec(
            num_scalar_prefetch=0,
            grid=(M_pad // tm, n_pad // tn, k_pad // tk),
            in_specs=[
                pl.BlockSpec((tm, tk), lambda i, j, k: (i, k)),      # x
                pl.BlockSpec((tk, tn), lambda i, j, k: (k, j)),      # W^T
                pl.BlockSpec((1, tn), lambda i, j, k: (0, j)),       # bias
                pl.BlockSpec((tm, r_pad), lambda i, j, k: (i, 0)),   # xA
                pl.BlockSpec((r_pad, tn), lambda i, j, k: (0, j)),   # B^T
            ],
            out_specs=pl.BlockSpec((tm, tn), lambda i, j, k: (i, j)),
            scratch_shapes=[pltpu.VMEM((tm, tn), jnp.float32)],
        ),
        compiler_params=pltpu.CompilerParams(
            dimension_semantics=("parallel", "parallel", "arbitrary"),
            vmem_limit_bytes=vmem_limit),
    )(x2d, wT, b2d, xa, bT)

    return out2d[:M, :out_features].reshape(*lead_shape, out_features)


# ---------------------------------------------------------------------------
# Reference + demo
# ---------------------------------------------------------------------------

def _reference(x, weight, bias, lora_A, lora_B, scaling):
    x = x.astype(jnp.float32)
    weight = weight.astype(jnp.float32)
    bias = bias.astype(jnp.float32)
    lora_A = lora_A.astype(jnp.float32)
    lora_B = lora_B.astype(jnp.float32)
    original = jnp.einsum("bsi,oi->bso", x, weight) + bias
    lora = jnp.einsum("bsr,or->bso",
                      jnp.einsum("bsi,ri->bsr", x, lora_A), lora_B) * scaling
    return original + lora


if __name__ == "__main__":
    # Small shapes consistent with the module.
    batch, seq = 2, 8
    in_features, out_features = 32, 32
    r, alpha = 16, 32
    scaling = alpha / r

    key = jax.random.PRNGKey(0)
    kx, kw, kb, ka, kB = jax.random.split(key, 5)

    x_f32 = jax.random.normal(kx, (batch, seq, in_features), dtype=jnp.float32)
    # Frozen original nn.Linear parameters (deterministic synthetic init).
    weight = jax.random.uniform(kw, (out_features, in_features),
                                dtype=jnp.float32, minval=-0.1, maxval=0.1)
    bias = jax.random.uniform(kb, (out_features,), dtype=jnp.float32,
                              minval=-0.1, maxval=0.1)
    # LoRA params. Module init: A ~ kaiming_uniform(a=sqrt(5)), B = zeros.
    bound_a = (6.0 / in_features) ** 0.5 / (1.0 + 5.0) ** 0.5
    lora_A = jax.random.uniform(ka, (r, in_features), dtype=jnp.float32,
                                minval=-bound_a, maxval=bound_a)
    # NOTE: module zero-inits B; use small random values so the low-rank path
    # is exercised non-trivially.
    lora_B = jax.random.uniform(kB, (out_features, r), dtype=jnp.float32,
                                minval=-0.05, maxval=0.05)

    ref = _reference(x_f32, weight, bias, lora_A, lora_B, scaling)

    # --- f32 path (tight tolerance) ---
    wT, b2d, aT, bT, n_true = prepare_lora_params(
        weight, bias, lora_A, lora_B, dtype=jnp.float32)
    out_f32 = lora_linear(x_f32, wT, b2d, aT, bT, n_true, scaling=scaling)
    out_f32 = jax.block_until_ready(out_f32)
    assert out_f32.shape == (batch, seq, out_features)
    assert jnp.allclose(out_f32, ref, atol=1e-4, rtol=1e-4), "f32 mismatch"

    # --- bf16 operand path (recommended on v5e/v6e/v7x; f32 accumulation) ---
    x_bf16 = x_f32.astype(jnp.bfloat16)
    wT16, b2d16, aT16, bT16, _ = prepare_lora_params(
        weight, bias, lora_A, lora_B, dtype=jnp.bfloat16)
    ref_bf16 = _reference(x_bf16, weight.astype(jnp.bfloat16),
                          bias.astype(jnp.bfloat16),
                          lora_A.astype(jnp.bfloat16),
                          lora_B.astype(jnp.bfloat16), scaling)
    out_bf16 = lora_linear(x_bf16, wT16, b2d16, aT16, bT16, n_true,
                           scaling=scaling)
    out_bf16 = jax.block_until_ready(out_bf16)
    assert out_bf16.shape == (batch, seq, out_features)
    assert jnp.allclose(out_bf16.astype(jnp.float32), ref_bf16,
                        atol=2e-2, rtol=2e-2), "bf16 mismatch"

    print("KERNEL_OK")
</pallas_src>

<mosaic_0001>
module attributes {stable_mosaic.version = 11 : i64} {
  func.func @_xa_kernel(%arg0: i32, %arg1: i32, %arg2: memref<16x256xf32, #tpu.memory_space<vmem>>, %arg3: memref<256x128xf32, #tpu.memory_space<vmem>>, %arg4: memref<16x128xf32, #tpu.memory_space<vmem>>, %arg5: memref<16x128xf32, #tpu.memory_space<vmem>>) attributes {dimension_semantics = [#tpu.dimension_semantics<parallel>, #tpu.dimension_semantics<arbitrary>], iteration_bounds = array<i64: 1, 1>, scalar_prefetch = 0 : i64, scratch_operands = 1 : i64, tpu.core_type = #tpu.core_type<tc>, window_params = [{transform_indices = @transform_0, window_bounds = array<i64: 16, 256>}, {transform_indices = @transform_1, window_bounds = array<i64: 256, 128>}, {transform_indices = @transform_2, window_bounds = array<i64: 16, 128>}]} {
    %c0 = arith.constant 0 : index
    %c0_0 = arith.constant 0 : index
    %0 = vector.load %arg2[%c0, %c0_0] : memref<16x256xf32, #tpu.memory_space<vmem>>, vector<16x256xf32>
    %c0_1 = arith.constant 0 : index
    %c0_2 = arith.constant 0 : index
    %1 = vector.load %arg3[%c0_1, %c0_2] : memref<256x128xf32, #tpu.memory_space<vmem>>, vector<256x128xf32>
    %cst = arith.constant dense<0.000000e+00> : vector<16x128xf32>
    %2 = tpu.matmul %0, %1, %cst {dimension_numbers = #tpu.dot_dimension_numbers<[1], [0], [0], [1], [0, 0, 1, 1], [], []>} : vector<16x256xf32>, vector<256x128xf32>, vector<16x128xf32> -> vector<16x128xf32>
    %c0_i32 = arith.constant 0 : i32
    %3 = arith.cmpi eq, %arg1, %c0_i32 : i32
    %4 = arith.extui %3 : i1 to i32
    %c0_i32_3 = arith.constant 0 : i32
    %5 = arith.cmpi ne, %4, %c0_i32_3 : i32
    scf.if %5 {
      %c0_8 = arith.constant 0 : index
      %c0_9 = arith.constant 0 : index
      %12 = vector.load %arg5[%c0_8, %c0_9] : memref<16x128xf32, #tpu.memory_space<vmem>>, vector<16x128xf32>
      tpu.vector_store %arg5[%c0_8, %c0_9], %2 {strides = array<i32>} : memref<16x128xf32, #tpu.memory_space<vmem>>, vector<16x128xf32>,
    } else {
    }
    %c0_i32_4 = arith.constant 0 : i32
    %6 = arith.cmpi ne, %arg1, %c0_i32_4 : i32
    %7 = arith.extui %6 : i1 to i32
    %c0_i32_5 = arith.constant 0 : i32
    %8 = arith.cmpi ne, %7, %c0_i32_5 : i32
    scf.if %8 {
      %c0_8 = arith.constant 0 : index
      %c0_9 = arith.constant 0 : index
      %12 = vector.load %arg5[%c0_8, %c0_9] : memref<16x128xf32, #tpu.memory_space<vmem>>, vector<16x128xf32>
      %13 = arith.addf %12, %2 : vector<16x128xf32>
      %c0_10 = arith.constant 0 : index
      %c0_11 = arith.constant 0 : index
      %14 = vector.load %arg5[%c0_10, %c0_11] : memref<16x128xf32, #tpu.memory_space<vmem>>, vector<16x128xf32>
      tpu.vector_store %arg5[%c0_10, %c0_11], %13 {strides = array<i32>} : memref<16x128xf32, #tpu.memory_space<vmem>>, vector<16x128xf32>,
    } else {
    }
    %c0_i32_6 = arith.constant 0 : i32
    %9 = arith.cmpi eq, %arg1, %c0_i32_6 : i32
    %10 = arith.extui %9 : i1 to i32
    %c0_i32_7 = arith.constant 0 : i32
    %11 = arith.cmpi ne, %10, %c0_i32_7 : i32
    scf.if %11 {
      %c0_8 = arith.constant 0 : index
      %c0_9 = arith.constant 0 : index
      %12 = vector.load %arg5[%c0_8, %c0_9] : memref<16x128xf32, #tpu.memory_space<vmem>>, vector<16x128xf32>
      %cst_10 = arith.constant 2.000000e+00 : f32
      %13 = vector.broadcast %cst_10 : f32 to vector<16x128xf32>
      %14 = arith.mulf %12, %13 : vector<16x128xf32>
      %c0_11 = arith.constant 0 : index
      %c0_12 = arith.constant 0 : index
      %15 = vector.load %arg4[%c0_11, %c0_12] : memref<16x128xf32, #tpu.memory_space<vmem>>, vector<16x128xf32>
      tpu.vector_store %arg4[%c0_11, %c0_12], %14 {strides = array<i32>} : memref<16x128xf32, #tpu.memory_space<vmem>>, vector<16x128xf32>,
    } else {
    }
    return
  }
  func.func @transform_0(%arg0: i32, %arg1: i32) -> (i32, i32) {
    %c0_i32 = arith.constant 0 : i32
    return %arg0, %arg1 : i32, i32
  }
  func.func @transform_1(%arg0: i32, %arg1: i32) -> (i32, i32) {
    %c0_i32 = arith.constant 0 : i32
    %c0_i32_0 = arith.constant 0 : i32
    return %arg1, %c0_i32 : i32, i32
  }
  func.func @transform_2(%arg0: i32, %arg1: i32) -> (i32, i32) {
    %c0_i32 = arith.constant 0 : i32
    %c0_i32_0 = arith.constant 0 : i32
    return %arg0, %c0_i32 : i32, i32
  }
}

</mosaic_0001>

<llo_original>
// kernel: tpu_custom_call.1
$region0: #{tpu_custom_call.1}
  #allocation0 [shape = 'u32[]', space=smem, size = 0x4, offset = 0x4, fixed_abs, tag = 'smem constant byte address 0x4 - core index']
  #allocation1 [shape = 'u32[144,128]{1,0:T(1,128)}', space=vmem, size = 0x12000, scoped, tag = 'internal scratch']
  #allocation2 [shape = 'f32[16,128]{1,0:T(8,128)}', space=vmem, size = 0x2000, scoped, tag = 'scratch operand']
  %s0 = inlined_call_operand.hbm [shape: f32[16,256], index: 0, kind: input, shape index: {}]
  %s1 = inlined_call_operand.hbm [shape: f32[256,128], index: 1, kind: input, shape index: {}]
  %s2 = inlined_call_operand.hbm [shape: f32[16,128], index: 2, kind: output, shape index: {}]
  %s3 = sld [smem:[#allocation0]]
  $region38: #{tpu_custom_call.1} parent=0
    _
  %s5 = ssub.s32 1, %s3
  %s6 = scalar_select 0, %s5, %s3
  $region1: #{tpu_custom_call.1} parent=0
    #allocation3 [shape = 'u8[16384]{0}', space=vmem, size = 0x4000, scoped, tag = 'input window, operand 0, single buffered']
    #allocation4 [shape = 's32[1]{0}', space=sflag, size = 0x4, scoped, tag = 'scoped memory for tpu_custom_call.1']
    #allocation5 [shape = 's32[1]{0}', space=sflag, size = 0x4, scoped, tag = 'scoped memory for tpu_custom_call.1']
    #allocation6 [shape = 'u8[131072]{0}', space=vmem, size = 0x20000, scoped, tag = 'input window, operand 1, single buffered']
    #allocation7 [shape = 's32[1]{0}', space=sflag, size = 0x4, scoped, tag = 'scoped memory for tpu_custom_call.1']
    #allocation8 [shape = 'u8[8192]{0}', space=vmem, size = 0x2000, scoped, tag = 'output window, operand 0, single buffered']
    %7 = vsyncpa [#allocation4], 0
    %8 = vsyncpa [#allocation7], 0
    %9 = vsyncpa [#allocation5], 0
    // Predicated region
    $region2: #{tpu_custom_call.1} parent=1 // pred_check
      _
    $region3: #{tpu_custom_call.1} parent=1 // pred_check_branch
      %11 = sbr.rel (0) target = $region5
    $region4: #{tpu_custom_call.1} parent=1 // pred_region
      %s13 = ssub.s32 512, 512
      %14 = vsyncadd [#allocation4], %s13
      %s15 = sshll.u32 [#allocation3], 4
      %s16 = int_to_ptr.vmem [resolvable:$true] %s15
      %21 = dma.hbm_to_vmem [thread:$0]  %s0, 512, %s16, [#allocation4], 256, 256, 16
    $region5: #{tpu_custom_call.1} parent=1 // pred_fallthru
      _
    // Predicated region
    $region6: #{tpu_custom_call.1} parent=1 // pred_check
      _
    $region7: #{tpu_custom_call.1} parent=1 // pred_check_branch
      %23 = sbr.rel (0) target = $region9
    $region8: #{tpu_custom_call.1} parent=1 // pred_region
      %s25 = ssub.s32 4096, 4096
      %26 = vsyncadd [#allocation7], %s25
      %s27 = sshll.u32 [#allocation6], 4
      %s28 = int_to_ptr.vmem [resolvable:$true] %s27
      %33 = dma.hbm_to_vmem [thread:$0]  %s1, 4096, %s28, [#allocation7], 128, 128, 8
    $region9: #{tpu_custom_call.1} parent=1 // pred_fallthru
      _
    // Predicated region
    $region10: #{tpu_custom_call.1} parent=1 // pred_check
      _
    $region11: #{tpu_custom_call.1} parent=1 // pred_check_branch
      %35 = sbr.rel (0) target = $region13
    $region12: #{tpu_custom_call.1} parent=1 // pred_region
      %36 = dma.done [#allocation4], 512
    $region13: #{tpu_custom_call.1} parent=1 // pred_fallthru
      _
    // Predicated region
    $region14: #{tpu_custom_call.1} parent=1 // pred_check
      _
    $region15: #{tpu_custom_call.1} parent=1 // pred_check_branch
      %38 = sbr.rel (0) target = $region17
    $region16: #{tpu_custom_call.1} parent=1 // pred_region
      %39 = dma.done [#allocation7], 4096
    $region17: #{tpu_custom_call.1} parent=1 // pred_fallthru
      _
    %v40 = vld [vmem:[#allocation3] sm:$0xff]
    %v41 = vld [vmem:[#allocation3 + $0x8] sm:$0xff]
    %v42 = vld [vmem:[#allocation3 + $0x10] sm:$0xff]
    %v43 = vld [vmem:[#allocation3 + $0x18] sm:$0xff]
    %v44 = vld [vmem:[#allocation6] sm:$0xff]
    %v45 = vld [vmem:[#allocation6 + $0x8] sm:$0xff]
    %v46 = vld [vmem:[#allocation6 + $0x10] sm:$0xff]
    %v47 = vld [vmem:[#allocation6 + $0x18] sm:$0xff]
    %v48 = vld [vmem:[#allocation6 + $0x20] sm:$0xff]
    %v49 = vld [vmem:[#allocation6 + $0x28] sm:$0xff]
    %v50 = vld [vmem:[#allocation6 + $0x30] sm:$0xff]
    %v51 = vld [vmem:[#allocation6 + $0x38] sm:$0xff]
    %v52 = vld [vmem:[#allocation6 + $0x40] sm:$0xff]
    %v53 = vld [vmem:[#allocation6 + $0x48] sm:$0xff]
    %v54 = vld [vmem:[#allocation6 + $0x50] sm:$0xff]
    %v55 = vld [vmem:[#allocation6 + $0x58] sm:$0xff]
    %v56 = vld [vmem:[#allocation6 + $0x60] sm:$0xff]
    %v57 = vld [vmem:[#allocation6 + $0x68] sm:$0xff]
    %v58 = vld [vmem:[#allocation6 + $0x70] sm:$0xff]
    %v59 = vld [vmem:[#allocation6 + $0x78] sm:$0xff]
    %v60 = vld [vmem:[#allocation6 + $0x80] sm:$0xff]
    %v61 = vld [vmem:[#allocation6 + $0x88] sm:$0xff]
    %v62 = vld [vmem:[#allocation6 + $0x90] sm:$0xff]
    %v63 = vld [vmem:[#allocation6 + $0x98] sm:$0xff]
    %v64 = vld [vmem:[#allocation6 + $0xa0] sm:$0xff]
    %v65 = vld [vmem:[#allocation6 + $0xa8] sm:$0xff]
    %v66 = vld [vmem:[#allocation6 + $0xb0] sm:$0xff]
    %v67 = vld [vmem:[#allocation6 + $0xb8] sm:$0xff]
    %v68 = vld [vmem:[#allocation6 + $0xc0] sm:$0xff]
    %v69 = vld [vmem:[#allocation6 + $0xc8] sm:$0xff]
    %v70 = vld [vmem:[#allocation6 + $0xd0] sm:$0xff]
    %v71 = vld [vmem:[#allocation6 + $0xd8] sm:$0xff]
    %v72 = vld [vmem:[#allocation6 + $0xe0] sm:$0xff]
    %v73 = vld [vmem:[#allocation6 + $0xe8] sm:$0xff]
    %v74 = vld [vmem:[#allocation6 + $0xf0] sm:$0xff]
    %v75 = vld [vmem:[#allocation6 + $0xf8] sm:$0xff]
    %76 = vmatprep.subr.mxu0 0.0
    %77 = vmatpush1.msra.mxu0 %v44
    %78 = vmatprep.subr.mxu0 0.0
    %79 = vmatpush1.msra.mxu0 %v45
    %80 = vmatprep.subr.mxu0 0.0
    %81 = vmatpush1.msra.mxu0 %v46
    %82 = vmatprep.subr.mxu0 0.0
    %83 = vmatpush1.msra.mxu0 %v47
    %84 = vmatprep.subr.mxu0 0.0
    %85 = vmatpush1.msra.mxu0 %v48
    %86 = vmatprep.subr.mxu0 0.0
    %87 = vmatpush1.msra.mxu0 %v49
    %88 = vmatprep.subr.mxu0 0.0
    %89 = vmatpush1.msra.mxu0 %v50
    %90 = vmatprep.subr.mxu0 0.0
    %91 = vmatpush1.msra.mxu0 %v51
    %92 = vmatprep.subr.mxu0 0.0
    %93 = vmatpush1.msra.mxu0 %v52
    %94 = vmatprep.subr.mxu0 0.0
    %95 = vmatpush1.msra.mxu0 %v53
    %96 = vmatprep.subr.mxu0 0.0
    %97 = vmatpush1.msra.mxu0 %v54
    %98 = vmatprep.subr.mxu0 0.0
    %99 = vmatpush1.msra.mxu0 %v55
    %100 = vmatprep.subr.mxu0 0.0
    %101 = vmatpush1.msra.mxu0 %v56
    %102 = vmatprep.subr.mxu0 0.0
    %103 = vmatpush1.msra.mxu0 %v57
    %104 = vmatprep.subr.mxu0 0.0
    %105 = vmatpush1.msra.mxu0 %v58
    %106 = vmatprep.subr.mxu0 0.0
    %107 = vmatpush1.msra.mxu0 %v59
    %108 = vmatprep.subr.mxu0 0.0
    %109 = vmatpush1.msra.mxu0 %v60
    %110 = vmatprep.subr.mxu0 0.0
    %111 = vmatpush1.msra.mxu0 %v61
    %112 = vmatprep.subr.mxu0 0.0
    %113 = vmatpush1.msra.mxu0 %v62
    %114 = vmatprep.subr.mxu0 0.0
    %115 = vmatpush1.msra.mxu0 %v63
    %116 = vmatprep.subr.mxu0 0.0
    %117 = vmatpush1.msra.mxu0 %v64
    %118 = vmatprep.subr.mxu0 0.0
    %119 = vmatpush1.msra.mxu0 %v65
    %120 = vmatprep.subr.mxu0 0.0
    %121 = vmatpush1.msra.mxu0 %v66
    %122 = vmatprep.subr.mxu0 0.0
    %123 = vmatpush1.msra.mxu0 %v67
    %124 = vmatprep.subr.mxu0 0.0
    %125 = vmatpush1.msra.mxu0 %v68
    %126 = vmatprep.subr.mxu0 0.0
    %127 = vmatpush1.msra.mxu0 %v69
    %128 = vmatprep.subr.mxu0 0.0
    %129 = vmatpush1.msra.mxu0 %v70
    %130 = vmatprep.subr.mxu0 0.0
    %131 = vmatpush1.msra.mxu0 %v71
    %132 = vmatprep.subr.mxu0 0.0
    %133 = vmatpush1.msra.mxu0 %v72
    %134 = vmatprep.subr.mxu0 0.0
    %135 = vmatpush1.msra.mxu0 %v73
    %136 = vmatprep.subr.mxu0 0.0
    %137 = vmatpush1.msra.mxu0 %v74
    %138 = vmatprep.subr.mxu0 0.0
    %139 = vmatpush1.msra.mxu0 %v75
    %140 = vmatprep.mubr.f32.mxu0 %v41
    %141 = vmatmul.mubr.f32.gmra.mrb[0].mxu0 %v40
    %v142 = vpop.f32.mrb[0].mxu0
    %v143 = vadd.f32 0.0, %v142
    %v144 = vpop.f32.mrb[0].mxu0
    %145 = vmatprep.mubr.f32.mxu0 %v43
    %146 = vmatmul.mubr.f32.gmra.mrb[0].mxu0 %v42
    %v147 = vpop.f32.mrb[0].mxu0
    %v148 = vadd.f32 0.0, %v147
    %v149 = vpop.f32.mrb[0].mxu0
    %150 = vdwg.mxu0
    %p151 = scmp.eq.s32.totalorder 0, 0
    // Predicated region
    $region18: #{tpu_custom_call.1} parent=1 // pred_check
      %p152 = pneg %p151
    $region19: #{tpu_custom_call.1} parent=1 // pred_check_branch
      %154 = sbr.rel (%p152) target = $region21
    $region20: #{tpu_custom_call.1} parent=1 // pred_region
      %155 = vst [vmem:[#allocation2] sm:$0xff] %v143
      %156 = vst [vmem:[#allocation2 + $0x8] sm:$0xff] %v148
    $region21: #{tpu_custom_call.1} parent=1 // pred_fallthru
      _
    %p157 = scmp.ne.s32.totalorder 0, 0
    // Predicated region
    $region22: #{tpu_custom_call.1} parent=1 // pred_check
      %p158 = pneg %p157
    $region23: #{tpu_custom_call.1} parent=1 // pred_check_branch
      %160 = sbr.rel (%p158) target = $region25
    $region24: #{tpu_custom_call.1} parent=1 // pred_region
      %v161 = vld [vmem:[#allocation2] sm:$0xff]
      %v162 = vld [vmem:[#allocation2 + $0x8] sm:$0xff]
      %v163 = vadd.f32 %v161, %v143
      %v164 = vadd.f32 %v162, %v148
      %165 = vst [vmem:[#allocation2] sm:$0xff] %v163
      %166 = vst [vmem:[#allocation2 + $0x8] sm:$0xff] %v164
    $region25: #{tpu_custom_call.1} parent=1 // pred_fallthru
      _
    // Predicated region
    $region26: #{tpu_custom_call.1} parent=1 // pred_check
      %p167 = pneg %p151
    $region27: #{tpu_custom_call.1} parent=1 // pred_check_branch
      %169 = sbr.rel (%p167) target = $region29
    $region28: #{tpu_custom_call.1} parent=1 // pred_region
      %v170 = vld [vmem:[#allocation2] sm:$0xff]
      %v171 = vld [vmem:[#allocation2 + $0x8] sm:$0xff]
      %v172 = vmul.f32 %v170, 2.0
      %v173 = vmul.f32 %v171, 2.0
      %174 = vst [vmem:[#allocation8] sm:$0xff] %v172
      %175 = vst [vmem:[#allocation8 + $0x8] sm:$0xff] %v173
    $region29: #{tpu_custom_call.1} parent=1 // pred_fallthru
      _
    // Predicated region
    $region30: #{tpu_custom_call.1} parent=1 // pred_check
      _
    $region31: #{tpu_custom_call.1} parent=1 // pred_check_branch
      %177 = sbr.rel (0) target = $region33
    $region32: #{tpu_custom_call.1} parent=1 // pred_region
      %s179 = ssub.s32 256, 256
      %180 = vsyncadd [#allocation5], %s179
      %s181 = sshll.u32 [#allocation8], 4
      %s182 = int_to_ptr.vmem [resolvable:$true] %s181
      %187 = dma.vmem_to_hbm [thread:$0]  %s182, 256, %s2, [#allocation5], 128, 128, 8
    $region33: #{tpu_custom_call.1} parent=1 // pred_fallthru
      _
    // Predicated region
    $region34: #{tpu_custom_call.1} parent=1 // pred_check
      _
    $region35: #{tpu_custom_call.1} parent=1 // pred_check_branch
      %189 = sbr.rel (0) target = $region37
    $region36: #{tpu_custom_call.1} parent=1 // pred_region
      %190 = dma.done [#allocation5], 256
    $region37: #{tpu_custom_call.1} parent=1 // pred_fallthru
      _
    %191 = vsyncpa [#allocation4], 1
    %192 = vsyncpa [#allocation7], 1
    %193 = vsyncpa [#allocation5], 1

</llo_original>
